<compile_context>
chip_gen: v7x
topology: tpu7x:2x2x1
jax: 0.10.0
libtpu: 0.0.40
codegen_flags: <defaults>
</compile_context>

<pallas_src>
import math
import jax
import jax.numpy as jnp
from jax.experimental import pallas as pl
from jax.experimental.pallas import tpu as pltpu


def _block2x2diag_kernel(x_ref, abcd_ref, o_ref):
    # x_ref:    (TB, size)     in VMEM (one batch tile)
    # abcd_ref: (4, size//2)   rows = A, B, C, D (resident across grid steps)
    # o_ref:    (TB, size)
    half = x_ref.shape[1] // 2
    x0 = x_ref[:, :half]          # (TB, half)  == input[:, 0, :]
    x1 = x_ref[:, half:]          # (TB, half)  == input[:, 1, :]
    a = abcd_ref[0:1, :]          # (1, half), broadcasts over batch rows
    b = abcd_ref[1:2, :]
    c = abcd_ref[2:3, :]
    d = abcd_ref[3:4, :]
    o_ref[:, :half] = a * x0 + b * x1
    o_ref[:, half:] = c * x0 + d * x1


def block2x2diag_forward(x, abcd, *, tile_rows=None,
                         vmem_budget_bytes=12 * 1024 * 1024):
    """x: (..., size) real.  abcd: (2, 2, size//2) real."""
    size = abcd.shape[-1] * 2
    assert size % 2 == 0
    assert x.shape[-1] == size
    orig_shape = x.shape
    xf = x.reshape(-1, size)                 # glue reshape (plain JAX)
    B = xf.shape[0]
    half = size // 2
    abcd4 = abcd.reshape(4, half)            # rows: A, B, C, D

    itemsize = jnp.dtype(x.dtype).itemsize

    if tile_rows is None:
        # Per grid step VMEM ~= 2 (in+out) * 2 (double-buffer) * TB * size * itemsize.
        # Budget is conservative (fits v5e's 16 MiB scoped-VMEM default).
        per_row_bytes = 4 * size * itemsize
        tb = max(8, vmem_budget_bytes // per_row_bytes)
        tb = min(tb, 1024)                   # biggest useful tile; ~85% of HBM roofline
        tb = max(8, (tb // 8) * 8)           # sublane-aligned
    else:
        tb = max(8, (int(tile_rows) // 8) * 8)
    # No need to exceed the (sublane-padded) batch.
    tb = min(tb, max(8, ((B + 7) // 8) * 8))
    # TODO(synk): for very wide `size` where even TB=8 blows the VMEM budget,
    # add a column grid axis (pass xf twice with top/bottom-half index_maps).

    # Cheap, bandwidth-bound op: tell the scheduler so it overlaps neighbours.
    cost = pl.CostEstimate(
        flops=6 * B * half,
        transcendentals=0,
        bytes_accessed=(2 * B * size + 4 * half) * itemsize,
    )

    out = pl.pallas_call(
        _block2x2diag_kernel,
        out_shape=jax.ShapeDtypeStruct((B, size), x.dtype),
        grid=(pl.cdiv(B, tb),),
        in_specs=[
            pl.BlockSpec((tb, size), lambda i: (i, 0)),      # batch tile
            pl.BlockSpec((4, half), lambda i: (0, 0)),       # ABCD stays resident
        ],
        out_specs=pl.BlockSpec((tb, size), lambda i: (i, 0)),
        compiler_params=pltpu.CompilerParams(
            dimension_semantics=("parallel",)),               # v7x: shard across 2 TCs
        cost_estimate=cost,
    )(xf, abcd4)
    return out.reshape(orig_shape)


def block2x2diag_reference(x, abcd):
    """Pure-JAX reference matching butterfly_factor_mult semantics."""
    size = abcd.shape[-1] * 2
    xf = x.reshape(-1, 2, size // 2)
    # out[b, i, k] = sum_j ABCD[i, j, k] * x[b, j, k]
    out = jnp.einsum('ijk,bjk->bik', abcd, xf)
    return out.reshape(x.shape)


if __name__ == "__main__":
    key = jax.random.PRNGKey(0)
    k_param, k_x, k_x2, k_x3 = jax.random.split(key, 4)

    size = 256                       # butterfly size (even; half=128 is lane-aligned)
    half = size // 2
    # Deterministic parameter init, matching torch.randn(ABCD_shape)/sqrt(2)
    ABCD = jax.random.normal(k_param, (2, 2, half), dtype=jnp.float32) * (
        1.0 / math.sqrt(2))

    # Example input (..., size): batch dims (2, 4), feature dim = size
    x = jax.random.normal(k_x, (2, 4, size), dtype=jnp.float32)
    y = jax.block_until_ready(block2x2diag_forward(x, ABCD))
    y_ref = block2x2diag_reference(x, ABCD)
    assert y.shape == x.shape and y.dtype == x.dtype
    assert jnp.allclose(y, y_ref, atol=1e-5, rtol=1e-5)

    # Batch not a multiple of 8: exercises Pallas output masking on the
    # padded last block.
    x2 = jax.random.normal(k_x2, (3, size), dtype=jnp.float32)
    y2 = jax.block_until_ready(block2x2diag_forward(x2, ABCD))
    assert jnp.allclose(y2, block2x2diag_reference(x2, ABCD), atol=1e-5, rtol=1e-5)

    # Multiple grid steps with a ragged final tile (tile_rows override).
    x3 = jax.random.normal(k_x3, (20, size), dtype=jnp.float32)
    y3 = jax.block_until_ready(block2x2diag_forward(x3, ABCD, tile_rows=8))
    assert jnp.allclose(y3, block2x2diag_reference(x3, ABCD), atol=1e-5, rtol=1e-5)

    # TODO(synk): complex=True path (complex_mul over trailing dim of 2) not
    # implemented; only the real branch of Block2x2Diag.forward is covered.
    print("KERNEL_OK")
</pallas_src>

<mosaic_0001>
module attributes {stable_mosaic.version = 11 : i64} {
  func.func @_block2x2diag_kernel(%arg0: i32, %arg1: memref<8x256xf32, #tpu.memory_space<vmem>>, %arg2: memref<4x128xf32, #tpu.memory_space<vmem>>, %arg3: memref<8x256xf32, #tpu.memory_space<vmem>>) attributes {dimension_semantics = [#tpu.dimension_semantics<parallel>], iteration_bounds = array<i64: 1>, scalar_prefetch = 0 : i64, scratch_operands = 0 : i64, tpu.core_type = #tpu.core_type<tc>, window_params = [{transform_indices = @transform_0, window_bounds = array<i64: 8, 256>}, {pipeline_mode = #tpu.pipeline_mode<synchronous>, transform_indices = @transform_1, window_bounds = array<i64: 4, 128>}, {transform_indices = @transform_2, window_bounds = array<i64: 8, 256>}]} {
    %c0 = arith.constant 0 : index
    %c0_0 = arith.constant 0 : index
    %0 = vector.load %arg1[%c0, %c0_0] : memref<8x256xf32, #tpu.memory_space<vmem>>, vector<8x128xf32>
    %c0_1 = arith.constant 0 : index
    %c128 = arith.constant 128 : index
    %1 = vector.load %arg1[%c0_1, %c128] : memref<8x256xf32, #tpu.memory_space<vmem>>, vector<8x128xf32>
    %c0_2 = arith.constant 0 : index
    %c0_3 = arith.constant 0 : index
    %2 = vector.load %arg2[%c0_2, %c0_3] : memref<4x128xf32, #tpu.memory_space<vmem>>, vector<1x128xf32>
    %c1 = arith.constant 1 : index
    %c0_4 = arith.constant 0 : index
    %3 = vector.load %arg2[%c1, %c0_4] : memref<4x128xf32, #tpu.memory_space<vmem>>, vector<1x128xf32>
    %c2 = arith.constant 2 : index
    %c0_5 = arith.constant 0 : index
    %4 = vector.load %arg2[%c2, %c0_5] : memref<4x128xf32, #tpu.memory_space<vmem>>, vector<1x128xf32>
    %c3 = arith.constant 3 : index
    %c0_6 = arith.constant 0 : index
    %5 = vector.load %arg2[%c3, %c0_6] : memref<4x128xf32, #tpu.memory_space<vmem>>, vector<1x128xf32>
    %6 = vector.broadcast %2 : vector<1x128xf32> to vector<8x128xf32>
    %7 = arith.mulf %6, %0 : vector<8x128xf32>
    %8 = vector.broadcast %3 : vector<1x128xf32> to vector<8x128xf32>
    %9 = arith.mulf %8, %1 : vector<8x128xf32>
    %10 = arith.addf %7, %9 : vector<8x128xf32>
    %c0_7 = arith.constant 0 : index
    %c0_8 = arith.constant 0 : index
    %11 = vector.load %arg3[%c0_7, %c0_8] : memref<8x256xf32, #tpu.memory_space<vmem>>, vector<8x128xf32>
    tpu.vector_store %arg3[%c0_7, %c0_8], %10 {strides = array<i32>} : memref<8x256xf32, #tpu.memory_space<vmem>>, vector<8x128xf32>,
    %12 = vector.broadcast %4 : vector<1x128xf32> to vector<8x128xf32>
    %13 = arith.mulf %12, %0 : vector<8x128xf32>
    %14 = vector.broadcast %5 : vector<1x128xf32> to vector<8x128xf32>
    %15 = arith.mulf %14, %1 : vector<8x128xf32>
    %16 = arith.addf %13, %15 : vector<8x128xf32>
    %c0_9 = arith.constant 0 : index
    %c128_10 = arith.constant 128 : index
    %17 = vector.load %arg3[%c0_9, %c128_10] : memref<8x256xf32, #tpu.memory_space<vmem>>, vector<8x128xf32>
    tpu.vector_store %arg3[%c0_9, %c128_10], %16 {strides = array<i32>} : memref<8x256xf32, #tpu.memory_space<vmem>>, vector<8x128xf32>,
    return
  }
  func.func @transform_0(%arg0: i32) -> (i32, i32) {
    %c0_i32 = arith.constant 0 : i32
    %c0_i32_0 = arith.constant 0 : i32
    return %arg0, %c0_i32 : i32, i32
  }
  func.func @transform_1(%arg0: i32) -> (i32, i32) {
    %c0_i32 = arith.constant 0 : i32
    %c0_i32_0 = arith.constant 0 : i32
    %c0_i32_1 = arith.constant 0 : i32
    return %c0_i32, %c0_i32_0 : i32, i32
  }
  func.func @transform_2(%arg0: i32) -> (i32, i32) {
    %c0_i32 = arith.constant 0 : i32
    %c0_i32_0 = arith.constant 0 : i32
    return %arg0, %c0_i32 : i32, i32
  }
}

</mosaic_0001>

<llo_original>
// kernel: tpu_custom_call.1
$region0: #{tpu_custom_call.1}
  #allocation0 [shape = 'u32[]', space=smem, size = 0x4, offset = 0x4, fixed_abs, tag = 'smem constant byte address 0x4 - core index']
  #allocation1 [shape = 'u32[144,128]{1,0:T(1,128)}', space=vmem, size = 0x12000, scoped, tag = 'internal scratch']
  %s0 = inlined_call_operand.hbm [shape: f32[8,256], index: 0, kind: input, shape index: {}]
  %s1 = inlined_call_operand.hbm [shape: f32[4,128], index: 1, kind: input, shape index: {}]
  %s2 = inlined_call_operand.hbm [shape: f32[8,256], index: 2, kind: output, shape index: {}]
  %s3 = sld [smem:[#allocation0]]
  $region26: #{tpu_custom_call.1} parent=0
    _
  %s5 = ssub.s32 1, %s3
  %s6 = scalar_select 0, %s5, %s3
  $region1: #{tpu_custom_call.1} parent=0
    #allocation2 [shape = 'u8[8192]{0}', space=vmem, size = 0x2000, scoped, tag = 'input window, operand 0, single buffered']
    #allocation3 [shape = 's32[1]{0}', space=sflag, size = 0x4, scoped, tag = 'scoped memory for tpu_custom_call.1']
    #allocation4 [shape = 's32[1]{0}', space=sflag, size = 0x4, scoped, tag = 'scoped memory for tpu_custom_call.1']
    #allocation5 [shape = 'u8[2048]{0}', space=vmem, size = 0x800, scoped, tag = 'input window, operand 1, single buffered']
    #allocation6 [shape = 's32[1]{0}', space=sflag, size = 0x4, scoped, tag = 'scoped memory for tpu_custom_call.1']
    #allocation7 [shape = 'u8[8192]{0}', space=vmem, size = 0x2000, scoped, tag = 'output window, operand 0, single buffered']
    %7 = vsyncpa [#allocation3], 0
    %8 = vsyncpa [#allocation6], 0
    %9 = vsyncpa [#allocation4], 0
    // Predicated region
    $region2: #{tpu_custom_call.1} parent=1 // pred_check
      _
    $region3: #{tpu_custom_call.1} parent=1 // pred_check_branch
      %11 = sbr.rel (0) target = $region5
    $region4: #{tpu_custom_call.1} parent=1 // pred_region
      %s13 = ssub.s32 256, 256
      %14 = vsyncadd [#allocation3], %s13
      %s16 = sshll.u32 [#allocation2], 4
      %s17 = int_to_ptr.vmem [resolvable:$true] %s16
      %19 = dma.hbm_to_vmem [thread:$0]  %s0, 256, %s17, [#allocation3]
    $region5: #{tpu_custom_call.1} parent=1 // pred_fallthru
      _
    // Predicated region
    $region6: #{tpu_custom_call.1} parent=1 // pred_check
      _
    $region7: #{tpu_custom_call.1} parent=1 // pred_check_branch
      %21 = sbr.rel (0) target = $region9
    $region8: #{tpu_custom_call.1} parent=1 // pred_region
      %s23 = ssub.s32 64, 64
      %24 = vsyncadd [#allocation6], %s23
      %s26 = sshll.u32 [#allocation5], 4
      %s27 = int_to_ptr.vmem [resolvable:$true] %s26
      %29 = dma.hbm_to_vmem [thread:$0]  %s1, 64, %s27, [#allocation6]
    $region9: #{tpu_custom_call.1} parent=1 // pred_fallthru
      _
    // Predicated region
    $region10: #{tpu_custom_call.1} parent=1 // pred_check
      _
    $region11: #{tpu_custom_call.1} parent=1 // pred_check_branch
      %31 = sbr.rel (0) target = $region13
    $region12: #{tpu_custom_call.1} parent=1 // pred_region
      %32 = dma.done [#allocation3], 256
    $region13: #{tpu_custom_call.1} parent=1 // pred_fallthru
      _
    // Predicated region
    $region14: #{tpu_custom_call.1} parent=1 // pred_check
      _
    $region15: #{tpu_custom_call.1} parent=1 // pred_check_branch
      %34 = sbr.rel (0) target = $region17
    $region16: #{tpu_custom_call.1} parent=1 // pred_region
      %35 = dma.done [#allocation6], 64
    $region17: #{tpu_custom_call.1} parent=1 // pred_fallthru
      _
    %v36 = vld [vmem:[#allocation2] sm:$0xff]
    %v37 = vld [vmem:[#allocation2 + $0x8] sm:$0xff]
    %v38 = vld [vmem:[#allocation5] sm:$0x1]
    %v39 = vld [vmem:[#allocation5 + $0x1] sm:$0x1]
    %v40 = vld [vmem:[#allocation5 + $0x2] sm:$0x1]
    %v41 = vld [vmem:[#allocation5 + $0x3] sm:$0x1]
    %v42 = vlaneseq
    %v43 = vshrl.u32 %v42, 7
    %v44 = vsub.s32 0, %v43
    %v45 = vrot.slane %v38, %v44
    %v46 = vmul.f32 %v45, %v36
    %v47 = vlaneseq
    %v48 = vshrl.u32 %v47, 7
    %v49 = vsub.s32 0, %v48
    %v50 = vrot.slane %v39, %v49
    %v51 = vmul.f32 %v50, %v37
    %v52 = vadd.f32 %v46, %v51
    %53 = vst [vmem:[#allocation7] sm:$0xff] %v52
    %v54 = vlaneseq
    %v55 = vshrl.u32 %v54, 7
    %v56 = vsub.s32 0, %v55
    %v57 = vrot.slane %v40, %v56
    %v58 = vmul.f32 %v57, %v36
    %v59 = vlaneseq
    %v60 = vshrl.u32 %v59, 7
    %v61 = vsub.s32 0, %v60
    %v62 = vrot.slane %v41, %v61
    %v63 = vmul.f32 %v62, %v37
    %v64 = vadd.f32 %v58, %v63
    %65 = vst [vmem:[#allocation7 + $0x8] sm:$0xff] %v64
    // Predicated region
    $region18: #{tpu_custom_call.1} parent=1 // pred_check
      _
    $region19: #{tpu_custom_call.1} parent=1 // pred_check_branch
      %67 = sbr.rel (0) target = $region21
    $region20: #{tpu_custom_call.1} parent=1 // pred_region
      %s69 = ssub.s32 256, 256
      %70 = vsyncadd [#allocation4], %s69
      %s72 = sshll.u32 [#allocation7], 4
      %s73 = int_to_ptr.vmem [resolvable:$true] %s72
      %75 = dma.vmem_to_hbm [thread:$0]  %s73, 256, %s2, [#allocation4]
    $region21: #{tpu_custom_call.1} parent=1 // pred_fallthru
      _
    // Predicated region
    $region22: #{tpu_custom_call.1} parent=1 // pred_check
      _
    $region23: #{tpu_custom_call.1} parent=1 // pred_check_branch
      %77 = sbr.rel (0) target = $region25
    $region24: #{tpu_custom_call.1} parent=1 // pred_region
      %78 = dma.done [#allocation4], 256
    $region25: #{tpu_custom_call.1} parent=1 // pred_fallthru
      _
    %79 = vsyncpa [#allocation3], 1
    %80 = vsyncpa [#allocation6], 1
    %81 = vsyncpa [#allocation4], 1

</llo_original>
